<compile_context>
chip_gen: v7x
topology: tpu7x:2x2x1
jax: 0.10.0
libtpu: 0.0.40
codegen_flags: <defaults>
</compile_context>

<pallas_src>
import functools

import jax
import jax.numpy as jnp
from jax import lax
from jax.experimental import pallas as pl
from jax.experimental.pallas import tpu as pltpu

# ---- problem sizes (small, consistent with the module defaults) ------------
B = 2        # batch
C1 = 4       # input channels  (c1)
C2 = 4       # output channels (c2); e=1.0 -> c_ = c2 and cv3 = Identity
CH = C2      # hidden channels c_
H = 16
W = 16
N_REP = 3    # RepC3 default n=3
BN_EPS = 1e-5

R = 2 * CH               # padded working row count (== 8 -> one f32 vreg sublane)
IMGS_PER_TILE = 1        # whole images per grid step (seam-free rolls/masks)


def _silu(x):
    # divide -> EUP reciprocal (exp already on EUP); frees VALU cycles.
    return x * pl.reciprocal(1.0 + jnp.exp(-x), approx=True)


# --------------------------- the Pallas kernel ------------------------------
def repc3_kernel(x_ref, w12_ref, w3x3_ref, bias_ref, mask_ref, o_ref,
                 *, ch, w, n_rep):
    """x_ref: (C1, N_tile), lane axis = flattened (whole images) y*W + x."""
    n = x_ref.shape[1]
    x = x_ref[...]                                       # (C1, N)

    # ---- cv1 + cv2 fused: one (R, C1) x (C1, N) matmul, one bias, one SiLU --
    # rows 0:ch = y1 = SiLU(BN(cv1(x))),  rows ch:R = y2 = SiLU(BN(cv2(x)))
    y12 = _silu(jnp.dot(w12_ref[...], x, preferred_element_type=jnp.float32)
                + bias_ref[:, 0:1])                      # (R, N)

    mask = mask_ref[...]                                 # (9*R, N), hoisted

    taps = [(dy, dx) for dy in (-1, 0, 1) for dx in (-1, 0, 1)]

    # z rows ch:R carry y2 into layer 0; the corresponding weight *columns*
    # are zero, and weight *rows* ch:R / their biases are zero, so the padding
    # rows of z are exactly zero from layer 1 onward.
    z = y12
    for layer in range(n_rep):
        pieces = []
        for dy, dx in taps:
            s = dy * w + dx                              # flat spatial shift
            # rolled[p] = z[p + s]; out-of-image lanes are zeroed by `mask`.
            pieces.append(z if s == 0 else pltpu.roll(z, shift=(-s) % n, axis=1))
        # every piece is (R=8, N): concat offsets are sublane-aligned copies
        patches = jnp.concatenate(pieces, axis=0) * mask  # (9*R, N)
        z = _silu(jnp.dot(w3x3_ref[layer], patches,
                          preferred_element_type=jnp.float32)
                  + bias_ref[:, 1 + layer:2 + layer])

    # ---- cv3 = Identity (c_ == c2): residual add, lane-dense store ----------
    o_ref[...] = z[:ch, :] + y12[ch:, :]


# ------------------- parameter fusion / packing (wrapper) --------------------
def _fuse_conv_bn(wconv, bn):
    gamma, beta, mean, var = bn
    scale = gamma / jnp.sqrt(var + BN_EPS)               # (c_out,)
    wf = wconv * scale[:, None, None, None]
    bf = beta - mean * scale
    return wf, bf


def pack_params(raw):
    """Fold BN into convs, RepVGG-fuse RepConv branches, pack 8-row slabs."""
    w_cv1, b_cv1 = _fuse_conv_bn(raw["cv1_w"], raw["cv1_bn"])
    w_cv2, b_cv2 = _fuse_conv_bn(raw["cv2_w"], raw["cv2_bn"])
    # fused cv1|cv2 1x1 weight: (R, C1)
    w12 = jnp.concatenate([w_cv1[:, :, 0, 0], w_cv2[:, :, 0, 0]], axis=0)
    bias_cols = [jnp.concatenate([b_cv1, b_cv2])]        # (R,)

    w3x3_list = []
    for i in range(N_REP):
        k3, b3 = _fuse_conv_bn(raw[f"rep{i}_k3"], raw[f"rep{i}_bn3"])
        k1, b1 = _fuse_conv_bn(raw[f"rep{i}_k1"], raw[f"rep{i}_bn1"])
        k = k3 + jnp.pad(k1, ((0, 0), (0, 0), (1, 1), (1, 1)))  # (CH, CH, 3, 3)
        # zero-pad channels CH -> R so every tap column block is 8 rows wide
        kp = jnp.zeros((R, R, 3, 3), jnp.float32).at[:CH, :CH].set(k)
        # tap-major stacked weight: columns ordered (dy, dx, c_in-padded)
        w3x3_list.append(jnp.transpose(kp, (0, 2, 3, 1)).reshape(R, 9 * R))
        bias_cols.append(jnp.concatenate(
            [b3 + b1, jnp.zeros((R - CH,), jnp.float32)]))
    w3x3 = jnp.stack(w3x3_list)                          # (N_REP, R, 9*R)
    biases = jnp.stack(bias_cols, axis=1)                # (R, 1 + N_REP)
    return w12, w3x3, biases


def build_mask_slab(imgs_per_tile, h, w, r):
    """Pre-broadcast boundary masks for the 9 taps: (9*r, imgs_per_tile*h*w)."""
    n_tile = imgs_per_tile * h * w
    idx = jnp.arange(n_tile, dtype=jnp.int32)
    yy = (idx // w) % h
    xx = idx % w
    rows = []
    for dy in (-1, 0, 1):
        for dx in (-1, 0, 1):
            m = ((yy >= -dy) & (yy < h - dy) & (xx >= -dx) & (xx < w - dx))
            rows.append(jnp.broadcast_to(m.astype(jnp.float32)[None, :],
                                         (r, n_tile)))
    return jnp.concatenate(rows, axis=0)                 # (9*r, n_tile)


@jax.jit
def repc3_forward(x, w12, w3x3, biases, mask_slab):
    b, c1, h, w = x.shape
    n = b * h * w
    n_tile = IMGS_PER_TILE * h * w
    x2d = jnp.transpose(x, (1, 0, 2, 3)).reshape(c1, n)  # (C1, B*H*W)
    kernel = functools.partial(repc3_kernel, ch=CH, w=w, n_rep=N_REP)
    out2d = pl.pallas_call(
        kernel,
        out_shape=jax.ShapeDtypeStruct((C2, n), jnp.float32),
        grid_spec=pltpu.PrefetchScalarGridSpec(
            num_scalar_prefetch=0,
            grid=(n // n_tile,),                          # batch-parallel tiles
            in_specs=[
                pl.BlockSpec((c1, n_tile), lambda i: (0, i)),
                pl.BlockSpec(w12.shape, lambda i: (0, 0)),
                pl.BlockSpec(w3x3.shape, lambda i: (0, 0, 0)),
                pl.BlockSpec(biases.shape, lambda i: (0, 0)),
                pl.BlockSpec(mask_slab.shape, lambda i: (0, 0)),
            ],
            out_specs=pl.BlockSpec((C2, n_tile), lambda i: (0, i)),
        ),
        compiler_params=pltpu.CompilerParams(
            dimension_semantics=("parallel",)),
    )(x2d, w12, w3x3, biases, mask_slab)
    return jnp.transpose(out2d.reshape(C2, b, h, w), (1, 0, 2, 3))


# ----------------- pure-JAX reference (unfused, eval-mode BN) ----------------
def _bn_eval(y, bn):
    gamma, beta, mean, var = bn
    inv = gamma / jnp.sqrt(var + BN_EPS)
    return (y - mean[None, :, None, None]) * inv[None, :, None, None] \
        + beta[None, :, None, None]


def _conv2d(x, wk, pad):
    return lax.conv_general_dilated(
        x, wk, window_strides=(1, 1),
        padding=((pad, pad), (pad, pad)),
        dimension_numbers=("NCHW", "OIHW", "NCHW"),
        precision=lax.Precision.HIGHEST)


def _silu_ref(x):
    return x * jax.nn.sigmoid(x)


def reference_forward(x, raw):
    y1 = _silu_ref(_bn_eval(_conv2d(x, raw["cv1_w"], 0), raw["cv1_bn"]))
    y2 = _silu_ref(_bn_eval(_conv2d(x, raw["cv2_w"], 0), raw["cv2_bn"]))
    z = y1
    for i in range(N_REP):
        a3 = _bn_eval(_conv2d(z, raw[f"rep{i}_k3"], 1), raw[f"rep{i}_bn3"])
        a1 = _bn_eval(_conv2d(z, raw[f"rep{i}_k1"], 0), raw[f"rep{i}_bn1"])
        z = _silu_ref(a3 + a1)
    return z + y2                                        # cv3 = Identity


# ------------------------------ init & main ----------------------------------
def init_raw_params(key):
    def bn_params(k, c):
        k1, k2, k3, k4 = jax.random.split(k, 4)
        gamma = 1.0 + 0.1 * jax.random.normal(k1, (c,), jnp.float32)
        beta = 0.1 * jax.random.normal(k2, (c,), jnp.float32)
        mean = 0.1 * jax.random.normal(k3, (c,), jnp.float32)
        var = jax.random.uniform(k4, (c,), jnp.float32, 0.5, 1.5)
        return (gamma, beta, mean, var)

    keys = jax.random.split(key, 32)
    ki = iter(keys)
    raw = {
        "cv1_w": 0.5 * jax.random.normal(next(ki), (CH, C1, 1, 1), jnp.float32),
        "cv1_bn": bn_params(next(ki), CH),
        "cv2_w": 0.5 * jax.random.normal(next(ki), (CH, C1, 1, 1), jnp.float32),
        "cv2_bn": bn_params(next(ki), CH),
    }
    for i in range(N_REP):
        raw[f"rep{i}_k3"] = 0.15 * jax.random.normal(
            next(ki), (CH, CH, 3, 3), jnp.float32)
        raw[f"rep{i}_bn3"] = bn_params(next(ki), CH)
        raw[f"rep{i}_k1"] = 0.15 * jax.random.normal(
            next(ki), (CH, CH, 1, 1), jnp.float32)
        raw[f"rep{i}_bn1"] = bn_params(next(ki), CH)
    return raw


if __name__ == "__main__":
    assert B % IMGS_PER_TILE == 0
    assert (IMGS_PER_TILE * H * W) % 128 == 0, "lane tile must be multiple of 128"

    key = jax.random.PRNGKey(0)
    k_x, k_p = jax.random.split(key)
    x = jax.random.normal(k_x, (B, C1, H, W), jnp.float32)
    raw = init_raw_params(k_p)

    w12, w3x3, biases = pack_params(raw)
    mask_slab = build_mask_slab(IMGS_PER_TILE, H, W, R)

    out = repc3_forward(x, w12, w3x3, biases, mask_slab)
    out = jax.block_until_ready(out)

    ref = reference_forward(x, raw)
    assert out.shape == (B, C2, H, W)
    err = jnp.max(jnp.abs(out - ref))
    assert jnp.allclose(out, ref, atol=2e-2, rtol=2e-2), f"max abs err {err}"
    print("KERNEL_OK")
</pallas_src>

<mosaic_0001>
module attributes {stable_mosaic.version = 11 : i64} {
  func.func @repc3_kernel(%arg0: i32, %arg1: memref<4x256xf32, #tpu.memory_space<vmem>>, %arg2: memref<8x4xf32, #tpu.memory_space<vmem>>, %arg3: memref<3x8x72xf32, #tpu.memory_space<vmem>>, %arg4: memref<8x4xf32, #tpu.memory_space<vmem>>, %arg5: memref<72x256xf32, #tpu.memory_space<vmem>>, %arg6: memref<4x256xf32, #tpu.memory_space<vmem>>) attributes {dimension_semantics = [#tpu.dimension_semantics<parallel>], iteration_bounds = array<i64: 2>, scalar_prefetch = 0 : i64, scratch_operands = 0 : i64, tpu.core_type = #tpu.core_type<tc>, window_params = [{transform_indices = @transform_0, window_bounds = array<i64: 4, 256>}, {pipeline_mode = #tpu.pipeline_mode<synchronous>, transform_indices = @transform_1, window_bounds = array<i64: 8, 4>}, {pipeline_mode = #tpu.pipeline_mode<synchronous>, transform_indices = @transform_2, window_bounds = array<i64: 3, 8, 72>}, {pipeline_mode = #tpu.pipeline_mode<synchronous>, transform_indices = @transform_3, window_bounds = array<i64: 8, 4>}, {pipeline_mode = #tpu.pipeline_mode<synchronous>, transform_indices = @transform_4, window_bounds = array<i64: 72, 256>}, {transform_indices = @transform_5, window_bounds = array<i64: 4, 256>}]} {
    %c0 = arith.constant 0 : index
    %c0_0 = arith.constant 0 : index
    %0 = vector.load %arg1[%c0, %c0_0] : memref<4x256xf32, #tpu.memory_space<vmem>>, vector<4x256xf32>
    %c0_1 = arith.constant 0 : index
    %c0_2 = arith.constant 0 : index
    %1 = vector.load %arg2[%c0_1, %c0_2] : memref<8x4xf32, #tpu.memory_space<vmem>>, vector<8x4xf32>
    %cst = arith.constant dense<0.000000e+00> : vector<8x256xf32>
    %2 = tpu.matmul %1, %0, %cst {dimension_numbers = #tpu.dot_dimension_numbers<[1], [0], [0], [1], [0, 0, 1, 1], [], []>} : vector<8x4xf32>, vector<4x256xf32>, vector<8x256xf32> -> vector<8x256xf32>
    %c0_3 = arith.constant 0 : index
    %c0_4 = arith.constant 0 : index
    %3 = vector.load %arg4[%c0_3, %c0_4] : memref<8x4xf32, #tpu.memory_space<vmem>>, vector<8x1xf32>
    %4 = vector.broadcast %3 : vector<8x1xf32> to vector<8x256xf32>
    %5 = arith.addf %2, %4 : vector<8x256xf32>
    %cst_5 = arith.constant 0.000000e+00 : f32
    %6 = vector.broadcast %cst_5 : f32 to vector<8x256xf32>
    %7 = arith.subf %6, %5 : vector<8x256xf32>
    %8 = math.exp %7 : vector<8x256xf32>
    %cst_6 = arith.constant 1.000000e+00 : f32
    %9 = vector.broadcast %cst_6 : f32 to vector<8x256xf32>
    %10 = arith.addf %9, %8 : vector<8x256xf32>
    %11 = tpu.reciprocal %10 {approx = true} : vector<8x256xf32> -> vector<8x256xf32>
    %12 = arith.mulf %5, %11 : vector<8x256xf32>
    %c0_7 = arith.constant 0 : index
    %c0_8 = arith.constant 0 : index
    %13 = vector.load %arg5[%c0_7, %c0_8] : memref<72x256xf32, #tpu.memory_space<vmem>>, vector<72x256xf32>
    %c17_i32 = arith.constant 17 : i32
    %14 = tpu.dynamic_rotate %12 by %c17_i32 dim 1 : vector<8x256xf32>, i32 -> vector<8x256xf32>
    %c16_i32 = arith.constant 16 : i32
    %15 = tpu.dynamic_rotate %12 by %c16_i32 dim 1 : vector<8x256xf32>, i32 -> vector<8x256xf32>
    %c15_i32 = arith.constant 15 : i32
    %16 = tpu.dynamic_rotate %12 by %c15_i32 dim 1 : vector<8x256xf32>, i32 -> vector<8x256xf32>
    %c1_i32 = arith.constant 1 : i32
    %17 = tpu.dynamic_rotate %12 by %c1_i32 dim 1 : vector<8x256xf32>, i32 -> vector<8x256xf32>
    %c255_i32 = arith.constant 255 : i32
    %18 = tpu.dynamic_rotate %12 by %c255_i32 dim 1 : vector<8x256xf32>, i32 -> vector<8x256xf32>
    %c241_i32 = arith.constant 241 : i32
    %19 = tpu.dynamic_rotate %12 by %c241_i32 dim 1 : vector<8x256xf32>, i32 -> vector<8x256xf32>
    %c240_i32 = arith.constant 240 : i32
    %20 = tpu.dynamic_rotate %12 by %c240_i32 dim 1 : vector<8x256xf32>, i32 -> vector<8x256xf32>
    %c239_i32 = arith.constant 239 : i32
    %21 = tpu.dynamic_rotate %12 by %c239_i32 dim 1 : vector<8x256xf32>, i32 -> vector<8x256xf32>
    %22 = tpu.concatenate %14, %15, %16, %17, %12, %18, %19, %20, %21 in 0 : vector<8x256xf32>, vector<8x256xf32>, vector<8x256xf32>, vector<8x256xf32>, vector<8x256xf32>, vector<8x256xf32>, vector<8x256xf32>, vector<8x256xf32>, vector<8x256xf32> -> vector<72x256xf32>
    %23 = arith.mulf %22, %13 : vector<72x256xf32>
    %c0_9 = arith.constant 0 : index
    %c0_10 = arith.constant 0 : index
    %c0_11 = arith.constant 0 : index
    %24 = vector.load %arg3[%c0_9, %c0_10, %c0_11] : memref<3x8x72xf32, #tpu.memory_space<vmem>>, vector<1x8x72xf32>
    %25 = vector.shape_cast %24 : vector<1x8x72xf32> to vector<8x72xf32>
    %cst_12 = arith.constant dense<0.000000e+00> : vector<8x256xf32>
    %26 = tpu.matmul %25, %23, %cst_12 {dimension_numbers = #tpu.dot_dimension_numbers<[1], [0], [0], [1], [0, 0, 1, 1], [], []>} : vector<8x72xf32>, vector<72x256xf32>, vector<8x256xf32> -> vector<8x256xf32>
    %c0_13 = arith.constant 0 : index
    %c1 = arith.constant 1 : index
    %27 = vector.load %arg4[%c0_13, %c1] : memref<8x4xf32, #tpu.memory_space<vmem>>, vector<8x1xf32>
    %28 = vector.broadcast %27 : vector<8x1xf32> to vector<8x256xf32>
    %29 = arith.addf %26, %28 : vector<8x256xf32>
    %cst_14 = arith.constant 0.000000e+00 : f32
    %30 = vector.broadcast %cst_14 : f32 to vector<8x256xf32>
    %31 = arith.subf %30, %29 : vector<8x256xf32>
    %32 = math.exp %31 : vector<8x256xf32>
    %cst_15 = arith.constant 1.000000e+00 : f32
    %33 = vector.broadcast %cst_15 : f32 to vector<8x256xf32>
    %34 = arith.addf %33, %32 : vector<8x256xf32>
    %35 = tpu.reciprocal %34 {approx = true} : vector<8x256xf32> -> vector<8x256xf32>
    %36 = arith.mulf %29, %35 : vector<8x256xf32>
    %c17_i32_16 = arith.constant 17 : i32
    %37 = tpu.dynamic_rotate %36 by %c17_i32_16 dim 1 : vector<8x256xf32>, i32 -> vector<8x256xf32>
    %c16_i32_17 = arith.constant 16 : i32
    %38 = tpu.dynamic_rotate %36 by %c16_i32_17 dim 1 : vector<8x256xf32>, i32 -> vector<8x256xf32>
    %c15_i32_18 = arith.constant 15 : i32
    %39 = tpu.dynamic_rotate %36 by %c15_i32_18 dim 1 : vector<8x256xf32>, i32 -> vector<8x256xf32>
    %c1_i32_19 = arith.constant 1 : i32
    %40 = tpu.dynamic_rotate %36 by %c1_i32_19 dim 1 : vector<8x256xf32>, i32 -> vector<8x256xf32>
    %c255_i32_20 = arith.constant 255 : i32
    %41 = tpu.dynamic_rotate %36 by %c255_i32_20 dim 1 : vector<8x256xf32>, i32 -> vector<8x256xf32>
    %c241_i32_21 = arith.constant 241 : i32
    %42 = tpu.dynamic_rotate %36 by %c241_i32_21 dim 1 : vector<8x256xf32>, i32 -> vector<8x256xf32>
    %c240_i32_22 = arith.constant 240 : i32
    %43 = tpu.dynamic_rotate %36 by %c240_i32_22 dim 1 : vector<8x256xf32>, i32 -> vector<8x256xf32>
    %c239_i32_23 = arith.constant 239 : i32
    %44 = tpu.dynamic_rotate %36 by %c239_i32_23 dim 1 : vector<8x256xf32>, i32 -> vector<8x256xf32>
    %45 = tpu.concatenate %37, %38, %39, %40, %36, %41, %42, %43, %44 in 0 : vector<8x256xf32>, vector<8x256xf32>, vector<8x256xf32>, vector<8x256xf32>, vector<8x256xf32>, vector<8x256xf32>, vector<8x256xf32>, vector<8x256xf32>, vector<8x256xf32> -> vector<72x256xf32>
    %46 = arith.mulf %45, %13 : vector<72x256xf32>
    %c1_24 = arith.constant 1 : index
    %c0_25 = arith.constant 0 : index
    %c0_26 = arith.constant 0 : index
    %47 = vector.load %arg3[%c1_24, %c0_25, %c0_26] : memref<3x8x72xf32, #tpu.memory_space<vmem>>, vector<1x8x72xf32>
    %48 = vector.shape_cast %47 : vector<1x8x72xf32> to vector<8x72xf32>
    %cst_27 = arith.constant dense<0.000000e+00> : vector<8x256xf32>
    %49 = tpu.matmul %48, %46, %cst_27 {dimension_numbers = #tpu.dot_dimension_numbers<[1], [0], [0], [1], [0, 0, 1, 1], [], []>} : vector<8x72xf32>, vector<72x256xf32>, vector<8x256xf32> -> vector<8x256xf32>
    %c0_28 = arith.constant 0 : index
    %c2 = arith.constant 2 : index
    %50 = vector.load %arg4[%c0_28, %c2] : memref<8x4xf32, #tpu.memory_space<vmem>>, vector<8x1xf32>
    %51 = vector.broadcast %50 : vector<8x1xf32> to vector<8x256xf32>
    %52 = arith.addf %49, %51 : vector<8x256xf32>
    %cst_29 = arith.constant 0.000000e+00 : f32
    %53 = vector.broadcast %cst_29 : f32 to vector<8x256xf32>
    %54 = arith.subf %53, %52 : vector<8x256xf32>
    %55 = math.exp %54 : vector<8x256xf32>
    %cst_30 = arith.constant 1.000000e+00 : f32
    %56 = vector.broadcast %cst_30 : f32 to vector<8x256xf32>
    %57 = arith.addf %56, %55 : vector<8x256xf32>
    %58 = tpu.reciprocal %57 {approx = true} : vector<8x256xf32> -> vector<8x256xf32>
    %59 = arith.mulf %52, %58 : vector<8x256xf32>
    %c17_i32_31 = arith.constant 17 : i32
    %60 = tpu.dynamic_rotate %59 by %c17_i32_31 dim 1 : vector<8x256xf32>, i32 -> vector<8x256xf32>
    %c16_i32_32 = arith.constant 16 : i32
    %61 = tpu.dynamic_rotate %59 by %c16_i32_32 dim 1 : vector<8x256xf32>, i32 -> vector<8x256xf32>
    %c15_i32_33 = arith.constant 15 : i32
    %62 = tpu.dynamic_rotate %59 by %c15_i32_33 dim 1 : vector<8x256xf32>, i32 -> vector<8x256xf32>
    %c1_i32_34 = arith.constant 1 : i32
    %63 = tpu.dynamic_rotate %59 by %c1_i32_34 dim 1 : vector<8x256xf32>, i32 -> vector<8x256xf32>
    %c255_i32_35 = arith.constant 255 : i32
    %64 = tpu.dynamic_rotate %59 by %c255_i32_35 dim 1 : vector<8x256xf32>, i32 -> vector<8x256xf32>
    %c241_i32_36 = arith.constant 241 : i32
    %65 = tpu.dynamic_rotate %59 by %c241_i32_36 dim 1 : vector<8x256xf32>, i32 -> vector<8x256xf32>
    %c240_i32_37 = arith.constant 240 : i32
    %66 = tpu.dynamic_rotate %59 by %c240_i32_37 dim 1 : vector<8x256xf32>, i32 -> vector<8x256xf32>
    %c239_i32_38 = arith.constant 239 : i32
    %67 = tpu.dynamic_rotate %59 by %c239_i32_38 dim 1 : vector<8x256xf32>, i32 -> vector<8x256xf32>
    %68 = tpu.concatenate %60, %61, %62, %63, %59, %64, %65, %66, %67 in 0 : vector<8x256xf32>, vector<8x256xf32>, vector<8x256xf32>, vector<8x256xf32>, vector<8x256xf32>, vector<8x256xf32>, vector<8x256xf32>, vector<8x256xf32>, vector<8x256xf32> -> vector<72x256xf32>
    %69 = arith.mulf %68, %13 : vector<72x256xf32>
    %c2_39 = arith.constant 2 : index
    %c0_40 = arith.constant 0 : index
    %c0_41 = arith.constant 0 : index
    %70 = vector.load %arg3[%c2_39, %c0_40, %c0_41] : memref<3x8x72xf32, #tpu.memory_space<vmem>>, vector<1x8x72xf32>
    %71 = vector.shape_cast %70 : vector<1x8x72xf32> to vector<8x72xf32>
    %cst_42 = arith.constant dense<0.000000e+00> : vector<8x256xf32>
    %72 = tpu.matmul %71, %69, %cst_42 {dimension_numbers = #tpu.dot_dimension_numbers<[1], [0], [0], [1], [0, 0, 1, 1], [], []>} : vector<8x72xf32>, vector<72x256xf32>, vector<8x256xf32> -> vector<8x256xf32>
    %c0_43 = arith.constant 0 : index
    %c3 = arith.constant 3 : index
    %73 = vector.load %arg4[%c0_43, %c3] : memref<8x4xf32, #tpu.memory_space<vmem>>, vector<8x1xf32>
    %74 = vector.broadcast %73 : vector<8x1xf32> to vector<8x256xf32>
    %75 = arith.addf %72, %74 : vector<8x256xf32>
    %cst_44 = arith.constant 0.000000e+00 : f32
    %76 = vector.broadcast %cst_44 : f32 to vector<8x256xf32>
    %77 = arith.subf %76, %75 : vector<8x256xf32>
    %78 = math.exp %77 : vector<8x256xf32>
    %cst_45 = arith.constant 1.000000e+00 : f32
    %79 = vector.broadcast %cst_45 : f32 to vector<8x256xf32>
    %80 = arith.addf %79, %78 : vector<8x256xf32>
    %81 = tpu.reciprocal %80 {approx = true} : vector<8x256xf32> -> vector<8x256xf32>
    %82 = arith.mulf %75, %81 : vector<8x256xf32>
    %83 = vector.extract_strided_slice %82 {offsets = [0, 0], sizes = [4, 256], strides = [1, 1]} : vector<8x256xf32> to vector<4x256xf32>
    %84 = vector.extract_strided_slice %12 {offsets = [4, 0], sizes = [4, 256], strides = [1, 1]} : vector<8x256xf32> to vector<4x256xf32>
    %85 = arith.addf %83, %84 : vector<4x256xf32>
    %c0_46 = arith.constant 0 : index
    %c0_47 = arith.constant 0 : index
    %86 = vector.load %arg6[%c0_46, %c0_47] : memref<4x256xf32, #tpu.memory_space<vmem>>, vector<4x256xf32>
    tpu.vector_store %arg6[%c0_46, %c0_47], %85 {strides = array<i32>} : memref<4x256xf32, #tpu.memory_space<vmem>>, vector<4x256xf32>,
    return
  }
  func.func @transform_0(%arg0: i32) -> (i32, i32) {
    %c0_i32 = arith.constant 0 : i32
    %c0_i32_0 = arith.constant 0 : i32
    return %c0_i32, %arg0 : i32, i32
  }
  func.func @transform_1(%arg0: i32) -> (i32, i32) {
    %c0_i32 = arith.constant 0 : i32
    %c0_i32_0 = arith.constant 0 : i32
    %c0_i32_1 = arith.constant 0 : i32
    return %c0_i32, %c0_i32_0 : i32, i32
  }
  func.func @transform_2(%arg0: i32) -> (i32, i32, i32) {
    %c0_i32 = arith.constant 0 : i32
    %c0_i32_0 = arith.constant 0 : i32
    %c0_i32_1 = arith.constant 0 : i32
    %c0_i32_2 = arith.constant 0 : i32
    return %c0_i32, %c0_i32_0, %c0_i32_1 : i32, i32, i32
  }
  func.func @transform_3(%arg0: i32) -> (i32, i32) {
    %c0_i32 = arith.constant 0 : i32
    %c0_i32_0 = arith.constant 0 : i32
    %c0_i32_1 = arith.constant 0 : i32
    return %c0_i32, %c0_i32_0 : i32, i32
  }
  func.func @transform_4(%arg0: i32) -> (i32, i32) {
    %c0_i32 = arith.constant 0 : i32
    %c0_i32_0 = arith.constant 0 : i32
    %c0_i32_1 = arith.constant 0 : i32
    return %c0_i32, %c0_i32_0 : i32, i32
  }
  func.func @transform_5(%arg0: i32) -> (i32, i32) {
    %c0_i32 = arith.constant 0 : i32
    %c0_i32_0 = arith.constant 0 : i32
    return %c0_i32, %arg0 : i32, i32
  }
}

</mosaic_0001>

<llo_original>
// kernel: repc3_forward.1
$region0: #{repc3_forward.1}
  #allocation0 [shape = 'u32[]', space=smem, size = 0x4, offset = 0x4, fixed_abs, tag = 'smem constant byte address 0x4 - core index']
  #allocation1 [shape = 'u32[144,128]{1,0:T(1,128)}', space=vmem, size = 0x12000, scoped, tag = 'internal scratch']
  %s0 = inlined_call_operand.vmem [shape: f32[4,512], index: 0, kind: input, shape index: {}]
  %s1 = inlined_call_operand.vmem [shape: f32[8,4], index: 1, kind: input, shape index: {}]
  %s2 = inlined_call_operand.vmem [shape: f32[3,8,72], index: 2, kind: input, shape index: {}]
  %s3 = inlined_call_operand.vmem [shape: f32[8,4], index: 3, kind: input, shape index: {}]
  %s4 = inlined_call_operand.vmem [shape: f32[72,256], index: 4, kind: input, shape index: {}]
  %s5 = inlined_call_operand.vmem [shape: f32[4,512], index: 5, kind: output, shape index: {}]
  %s6 = sld [smem:[#allocation0]]
  $region53: #{repc3_forward.1} parent=0
    _
  %s8 = ssub.s32 1, %s6
  %s9 = scalar_select 0, %s8, %s6
  loop: start=0, step=1, limit=4
  $region2: #{repc3_forward.1} parent=0 // loop_pre_header
    _
  $region3: #{repc3_forward.1} parent=0 // loop_header
    %s11 = sphi 0, %s15
    %p12 = scmp.ge.s32.totalorder %s11, 4
    %s21 = sphi 0, %s23
    %s24 = sphi 0, %s21
    %s25 = sphi 0, %s24
    %s41 = sphi 0, %s25
    %s45 = sphi 0, %s45
    %s47 = sphi 0, %s45
    %s48 = sphi 0, %s47
    %s62 = sphi 0, %s48
    %s66 = sphi 0, %s66
    %s68 = sphi 0, %s66
    %s69 = sphi 0, %s68
    %s83 = sphi 0, %s69
    %s87 = sphi 0, %s87
    %s89 = sphi 0, %s87
    %s90 = sphi 0, %s89
    %s104 = sphi 0, %s90
    %s108 = sphi 0, %s108
    %s110 = sphi 0, %s108
    %s111 = sphi 0, %s110
    %s125 = sphi 0, %s111
    %s131 = sphi 0, %s133
    %s134 = sphi 0, %s131
    %s135 = sphi 0, %s134
    %s151 = sphi 0, %s135
  $region4: #{repc3_forward.1} parent=0 // loop_header_branch
    %14 = sbr.rel (%p12) target = $region8
  $region5: #{repc3_forward.1} parent=0 // loop_body
    %s16 = ssub.s32 %s11, 1
    %s17 = ssub.s32 %s11, 2
    %s18 = sadd.s32 %s11, 1
    %s19 = ssub.s32 %s11, %s18
    %p20 = scmp.eq.s32.totalorder %s19, 0
    %s22 = sadd.s32 %s21, 1
    %s23 = scalar_select %p20, %s21, %s22
    %p26 = pneg %p20
    %p27 = scmp.eq.s32.totalorder %s11, 1
    %p28 = por %p26, %p27
    %p29 = scmp.ne.s32.totalorder %s21, %s24
    %p30 = scmp.eq.s32.totalorder %s11, 0
    %p31 = por %p29, %p30
    %p32 = scmp.ne.s32.totalorder %s21, %s24
    %p33 = scmp.eq.s32.totalorder %s16, 1
    %p34 = por %p32, %p33
    %p35 = scmp.ne.s32.totalorder %s24, %s25
    %p36 = scmp.eq.s32.totalorder %s16, 0
    %p37 = por %p35, %p36
    %p38 = scmp.ne.s32.totalorder %s24, %s25
    %p39 = scmp.eq.s32.totalorder %s17, 1
    %p40 = por %p38, %p39
    %p42 = scmp.ne.s32.totalorder %s25, %s41
    %p43 = scmp.eq.s32.totalorder %s17, 0
    %p44 = por %p42, %p43
    %s46 = sadd.s32 %s45, 1
    %p49 = scmp.eq.s32.totalorder %s11, 1
    %p50 = scmp.ne.s32.totalorder %s45, %s47
    %p51 = scmp.eq.s32.totalorder %s11, 0
    %p52 = por %p50, %p51
    %p53 = scmp.ne.s32.totalorder %s45, %s47
    %p54 = scmp.eq.s32.totalorder %s16, 1
    %p55 = por %p53, %p54
    %p56 = scmp.ne.s32.totalorder %s47, %s48
    %p57 = scmp.eq.s32.totalorder %s16, 0
    %p58 = por %p56, %p57
    %p59 = scmp.ne.s32.totalorder %s47, %s48
    %p60 = scmp.eq.s32.totalorder %s17, 1
    %p61 = por %p59, %p60
    %p63 = scmp.ne.s32.totalorder %s48, %s62
    %p64 = scmp.eq.s32.totalorder %s17, 0
    %p65 = por %p63, %p64
    %s67 = sadd.s32 %s66, 1
    %p70 = scmp.eq.s32.totalorder %s11, 1
    %p71 = scmp.ne.s32.totalorder %s66, %s68
    %p72 = scmp.eq.s32.totalorder %s11, 0
    %p73 = por %p71, %p72
    %p74 = scmp.ne.s32.totalorder %s66, %s68
    %p75 = scmp.eq.s32.totalorder %s16, 1
    %p76 = por %p74, %p75
    %p77 = scmp.ne.s32.totalorder %s68, %s69
    %p78 = scmp.eq.s32.totalorder %s16, 0
    %p79 = por %p77, %p78
    %p80 = scmp.ne.s32.totalorder %s68, %s69
    %p81 = scmp.eq.s32.totalorder %s17, 1
    %p82 = por %p80, %p81
    %p84 = scmp.ne.s32.totalorder %s69, %s83
    %p85 = scmp.eq.s32.totalorder %s17, 0
    %p86 = por %p84, %p85
    %s88 = sadd.s32 %s87, 1
    %p91 = scmp.eq.s32.totalorder %s11, 1
    %p92 = scmp.ne.s32.totalorder %s87, %s89
    %p93 = scmp.eq.s32.totalorder %s11, 0
    %p94 = por %p92, %p93
    %p95 = scmp.ne.s32.totalorder %s87, %s89
    %p96 = scmp.eq.s32.totalorder %s16, 1
    %p97 = por %p95, %p96
    %p98 = scmp.ne.s32.totalorder %s89, %s90
    %p99 = scmp.eq.s32.totalorder %s16, 0
    %p100 = por %p98, %p99
    %p101 = scmp.ne.s32.totalorder %s89, %s90
    %p102 = scmp.eq.s32.totalorder %s17, 1
    %p103 = por %p101, %p102
    %p105 = scmp.ne.s32.totalorder %s90, %s104
    %p106 = scmp.eq.s32.totalorder %s17, 0
    %p107 = por %p105, %p106
    %s109 = sadd.s32 %s108, 1
    %p112 = scmp.eq.s32.totalorder %s11, 1
    %p113 = scmp.ne.s32.totalorder %s108, %s110
    %p114 = scmp.eq.s32.totalorder %s11, 0
    %p115 = por %p113, %p114
    %p116 = scmp.ne.s32.totalorder %s108, %s110
    %p117 = scmp.eq.s32.totalorder %s16, 1
    %p118 = por %p116, %p117
    %p119 = scmp.ne.s32.totalorder %s110, %s111
    %p120 = scmp.eq.s32.totalorder %s16, 0
    %p121 = por %p119, %p120
    %p122 = scmp.ne.s32.totalorder %s110, %s111
    %p123 = scmp.eq.s32.totalorder %s17, 1
    %p124 = por %p122, %p123
    %p126 = scmp.ne.s32.totalorder %s111, %s125
    %p127 = scmp.eq.s32.totalorder %s17, 0
    %p128 = por %p126, %p127
    %s129 = ssub.s32 %s11, %s18
    %p130 = scmp.eq.s32.totalorder %s129, 0
    %s132 = sadd.s32 %s131, 1
    %s133 = scalar_select %p130, %s131, %s132
    %p136 = pneg %p130
    %p137 = scmp.eq.s32.totalorder %s11, 1
    %p138 = por %p136, %p137
    %p139 = scmp.ne.s32.totalorder %s131, %s134
    %p140 = scmp.eq.s32.totalorder %s11, 0
    %p141 = por %p139, %p140
    %p142 = scmp.ne.s32.totalorder %s131, %s134
    %p143 = scmp.eq.s32.totalorder %s16, 1
    %p144 = por %p142, %p143
    %p145 = scmp.ne.s32.totalorder %s134, %s135
    %p146 = scmp.eq.s32.totalorder %s16, 0
    %p147 = por %p145, %p146
    %p148 = scmp.ne.s32.totalorder %s134, %s135
    %p149 = scmp.eq.s32.totalorder %s17, 1
    %p150 = por %p148, %p149
    %p152 = scmp.ne.s32.totalorder %s135, %s151
    %p153 = scmp.eq.s32.totalorder %s17, 0
    %p154 = por %p152, %p153
    %p155 = scmp.le.s32.totalorder 1, %s11
    %p156 = scmp.lt.s32.totalorder %s11, 3
    %p157 = pnand %p155, %p156
    %p158 = pneg %p157
    // Predicated region
    $region9: #{repc3_forward.1} parent=5 // pred_check
      _
    $region10: #{repc3_forward.1} parent=5 // pred_check_branch
      %160 = sbr.rel (%p157) target = $region12
    $region11: #{repc3_forward.1} parent=5 // pred_region
      %s161 = ssub.s32 %s11, 1
      // Predicated region
      $region13: #{repc3_forward.1} parent=11 // pred_check
        %p162 = pneg %p58
      $region14: #{repc3_forward.1} parent=11 // pred_check_branch
        %164 = sbr.rel (%p162) target = $region16
      $region15: #{repc3_forward.1} parent=11 // pred_region
        _
      $region16: #{repc3_forward.1} parent=11 // pred_fallthru
        _
      // Predicated region
      $region17: #{repc3_forward.1} parent=11 // pred_check
        %p165 = pneg %p79
      $region18: #{repc3_forward.1} parent=11 // pred_check_branch
        %167 = sbr.rel (%p165) target = $region20
      $region19: #{repc3_forward.1} parent=11 // pred_region
        _
      $region20: #{repc3_forward.1} parent=11 // pred_fallthru
        _
      // Predicated region
      $region21: #{repc3_forward.1} parent=11 // pred_check
        %p168 = pneg %p100
      $region22: #{repc3_forward.1} parent=11 // pred_check_branch
        %170 = sbr.rel (%p168) target = $region24
      $region23: #{repc3_forward.1} parent=11 // pred_region
        _
      $region24: #{repc3_forward.1} parent=11 // pred_fallthru
        _
      // Predicated region
      $region25: #{repc3_forward.1} parent=11 // pred_check
        %p171 = pneg %p121
      $region26: #{repc3_forward.1} parent=11 // pred_check_branch
        %173 = sbr.rel (%p171) target = $region28
      $region27: #{repc3_forward.1} parent=11 // pred_region
        _
      $region28: #{repc3_forward.1} parent=11 // pred_fallthru
        _
    $region12: #{repc3_forward.1} parent=5 // pred_fallthru
      _
    %p174 = scmp.lt.s32.totalorder %s11, 2
    // Predicated region
    $region29: #{repc3_forward.1} parent=5 // pred_check
      %p175 = pneg %p174
    $region30: #{repc3_forward.1} parent=5 // pred_check_branch
      %177 = sbr.rel (%p175) target = $region32
    $region31: #{repc3_forward.1} parent=5 // pred_region
      // Predicated region
      $region33: #{repc3_forward.1} parent=31 // pred_check
        %p178 = pneg %p31
      $region34: #{repc3_forward.1} parent=31 // pred_check_branch
        %180 = sbr.rel (%p178) target = $region36
      $region35: #{repc3_forward.1} parent=31 // pred_region
        %s181 = smul.u32 2, %s11
        %p182 = scmp.lt.s32.totalorder %s181, 3
        %s183 = scalar_select %p182, %s181, 3
        %s184 = smul.addr %s183, 4
        %s185 = scalar_lea.vmem %s0, %s184
        %s186 = smul.u32 2, %s11
      $region36: #{repc3_forward.1} parent=31 // pred_fallthru
        _
    $region32: #{repc3_forward.1} parent=5 // pred_fallthru
      _
    %p187 = scmp.le.s32.totalorder 1, %s11
    %p188 = scmp.lt.s32.totalorder %s11, 3
    %p189 = pnand %p187, %p188
    %p190 = pneg %p189
    // Predicated region
    $region37: #{repc3_forward.1} parent=5 // pred_check
      _
    $region38: #{repc3_forward.1} parent=5 // pred_check_branch
      %192 = sbr.rel (%p189) target = $region40
    $region39: #{repc3_forward.1} parent=5 // pred_region
      %s193 = ssub.s32 %s11, 1
      %s194 = smul.u32 2, %s16
      %p195 = scmp.lt.s32.totalorder %s194, 3
      %s196 = scalar_select %p195, %s194, 3
      %s197 = smul.addr %s196, 4
      %s198 = scalar_lea.vmem %s0, %s197
      %p199 = pneg %p37
      %p200 = pneg %p34
      %p201 = pneg %p58
      %p202 = pneg %p55
      %p203 = pneg %p79
      %p204 = pneg %p76
      %p205 = pneg %p100
      %p206 = pneg %p97
      %p207 = pneg %p121
      %p208 = pneg %p118
      %p209 = pneg %p147
      %p210 = pneg %p144
      %s211 = smul.u32 2, %s16
      %p212 = scmp.lt.s32.totalorder %s211, 3
      %s213 = scalar_select %p212, %s211, 3
      %s214 = smul.addr %s213, 4
      %s215 = scalar_lea.vmem %s5, %s214
      %s216 = smul.u32 2, %s16
      %p217 = scmp.lt.s32.totalorder %s216, 3
      %s218 = scalar_select %p217, %s216, 3
      %s219 = smul.addr %s218, 4
      %s220 = scalar_lea.vmem %s0, %s219
      %s221 = smul.u32 2, %s16
      %s222 = smul.u32 2, %s16
      %p223 = scmp.lt.s32.totalorder %s222, 3
      %s224 = scalar_select %p223, %s222, 3
      %s225 = smul.addr %s224, 4
      %s226 = scalar_lea.vmem %s5, %s225
      %s227 = smul.u32 2, %s16
      %v228 = vld [vmem:[%s220] sm:$0xff]
      %v229 = vld [vmem:[%s1] sm:$0xff]
      %v230 = vld [vmem:[%s3] sm:$0xff]
      %232 = vset.pattern.permute.xlu0 0
      %233 = vperm.xlu0 %232, %v230
      %v234 = vpop.permute.xlu0 %233
      %v237 = vcombine.high %v228, %v228
      %vm238 = vcmask 31744
      %v240 = vsel %vm238, %v229, 0
      %vm242 = vcmask 1043456
      %v243 = vsel %vm242, %v228, 0
      %v245 = vsel %vm242, %v237, 0
      %247 = vmatprep.subr.mxu0 %v245
      %248 = vmatpush1.msra.mxu0 %v243
      %249 = vmatprep.subr.mxu0 0.0
      %250 = vmatpush1.msra.mxu0 0.0
      %251 = vmatprep.subr.mxu0 0.0
      %252 = vmatpush1.msra.mxu0 0.0
      %253 = vmatprep.subr.mxu0 0.0
      %254 = vmatpush1.msra.mxu0 0.0
      %255 = vmatprep.subr.mxu0 0.0
      %256 = vmatpush1.msra.mxu0 0.0
      %257 = vmatprep.subr.mxu0 0.0
      %258 = vmatpush1.msra.mxu0 0.0
      %259 = vmatprep.subr.mxu0 0.0
      %260 = vmatpush1.msra.mxu0 0.0
      %261 = vmatprep.subr.mxu0 0.0
      %262 = vmatpush1.msra.mxu0 0.0
      %263 = vmatprep.subr.mxu0 0.0
      %264 = vmatpush1.msra.mxu0 0.0
      %265 = vmatprep.subr.mxu0 0.0
      %266 = vmatpush1.msra.mxu0 0.0
      %267 = vmatprep.subr.mxu0 0.0
      %268 = vmatpush1.msra.mxu0 0.0
      %269 = vmatprep.subr.mxu0 0.0
      %270 = vmatpush1.msra.mxu0 0.0
      %271 = vmatprep.subr.mxu0 0.0
      %272 = vmatpush1.msra.mxu0 0.0
      %273 = vmatprep.subr.mxu0 0.0
      %274 = vmatpush1.msra.mxu0 0.0
      %275 = vmatprep.subr.mxu0 0.0
      %276 = vmatpush1.msra.mxu0 0.0
      %277 = vmatprep.subr.mxu0 0.0
      %278 = vmatpush1.msra.mxu0 0.0
      %279 = vmatprep.subr.mxu0 0.0
      %280 = vmatpush1.msra.mxu0 0.0
      %281 = vmatprep.subr.mxu0 0.0
      %282 = vmatpush1.msra.mxu0 0.0
      %283 = vmatprep.subr.mxu0 0.0
      %284 = vmatpush1.msra.mxu0 0.0
      %285 = vmatprep.subr.mxu0 0.0
      %286 = vmatpush1.msra.mxu0 0.0
      %287 = vmatprep.subr.mxu0 0.0
      %288 = vmatpush1.msra.mxu0 0.0
      %289 = vmatprep.subr.mxu0 0.0
      %290 = vmatpush1.msra.mxu0 0.0
      %291 = vmatprep.subr.mxu0 0.0
      %292 = vmatpush1.msra.mxu0 0.0
      %293 = vmatprep.subr.mxu0 0.0
      %294 = vmatpush1.msra.mxu0 0.0
      %295 = vmatprep.subr.mxu0 0.0
      %296 = vmatpush1.msra.mxu0 0.0
      %297 = vmatprep.subr.mxu0 0.0
      %298 = vmatpush1.msra.mxu0 0.0
      %299 = vmatprep.subr.mxu0 0.0
      %300 = vmatpush1.msra.mxu0 0.0
      %301 = vmatprep.subr.mxu0 0.0
      %302 = vmatpush1.msra.mxu0 0.0
      %303 = vmatprep.subr.mxu0 0.0
      %304 = vmatpush1.msra.mxu0 0.0
      %305 = vmatprep.subr.mxu0 0.0
      %306 = vmatpush1.msra.mxu0 0.0
      %307 = vmatprep.subr.mxu0 0.0
      %308 = vmatpush1.msra.mxu0 0.0
      %309 = vmatprep.subr.mxu0 0.0
      %310 = vmatpush1.msra.mxu0 0.0
      %311 = vmatprep.mubr.f32.mxu0 0.0
      %312 = vmatmul.mubr.f32.gmra.mrb[0].mxu0 %v240
      %v313 = vpop.f32.mrb[0].mxu0
      %v314 = vadd.f32 %v234, %v313
      %v315 = vpop.f32.mrb[0].mxu0
      %v316 = vadd.f32 %v234, %v315
      %317 = vdwg.mxu0
      %v318 = vsub.f32 0.0, %v314
      %v319 = vsub.f32 0.0, %v316
      %v320 = vmul.f32 %v318, 1.442695
      %v321 = vpow.pop %v320
      %v322 = vmul.f32 %v319, 1.442695
      %v323 = vpow.pop %v322
      %v324 = vadd.f32 %v321, 1.0
      %v325 = vadd.f32 %v323, 1.0
      %v326 = vrcp.pop %v324
      %v327 = vrcp.pop %v325
      %v328 = vmul.f32 %v314, %v326
      %v329 = vmul.f32 %v316, %v327
      %v330 = vld [vmem:[%s4] sm:$0xff]
      %v331 = vld [vmem:[%s4 + $0x8] sm:$0xff]
      %v332 = vld [vmem:[%s4 + $0x10] sm:$0xff]
      %v333 = vld [vmem:[%s4 + $0x18] sm:$0xff]
      %v334 = vld [vmem:[%s4 + $0x20] sm:$0xff]
      %v335 = vld [vmem:[%s4 + $0x28] sm:$0xff]
      %v336 = vld [vmem:[%s4 + $0x30] sm:$0xff]
      %v337 = vld [vmem:[%s4 + $0x38] sm:$0xff]
      %v338 = vld [vmem:[%s4 + $0x40] sm:$0xff]
      %v339 = vld [vmem:[%s4 + $0x48] sm:$0xff]
      %v340 = vld [vmem:[%s4 + $0x50] sm:$0xff]
      %v341 = vld [vmem:[%s4 + $0x58] sm:$0xff]
      %v342 = vld [vmem:[%s4 + $0x60] sm:$0xff]
      %v343 = vld [vmem:[%s4 + $0x68] sm:$0xff]
      %v344 = vld [vmem:[%s4 + $0x70] sm:$0xff]
      %v345 = vld [vmem:[%s4 + $0x78] sm:$0xff]
      %v346 = vld [vmem:[%s4 + $0x80] sm:$0xff]
      %v347 = vld [vmem:[%s4 + $0x88] sm:$0xff]
      %348 = vrot.lane.b32.xlu0 %v328, 17
      %v349 = vpop.permute.xlu0 %348
      %350 = vrot.lane.b32.xlu0 %v329, 17
      %v351 = vpop.permute.xlu0 %350
      %v352 = vlaneseq
      %v353 = vand.u32 %v352, 127
      %vm354 = vcmp.lt.s32.totalorder %v353, 17
      %v355 = vsel %vm354, %v349, %v351
      %v356 = vsel %vm354, %v351, %v349
      %357 = vrot.lane.b32.xlu0 %v328, 16
      %v358 = vpop.permute.xlu0 %357
      %359 = vrot.lane.b32.xlu0 %v329, 16
      %v360 = vpop.permute.xlu0 %359
      %vm361 = vcmp.lt.s32.totalorder %v353, 16
      %v362 = vsel %vm361, %v358, %v360
      %v363 = vsel %vm361, %v360, %v358
      %364 = vrot.lane.b32.xlu0 %v328, 15
      %v365 = vpop.permute.xlu0 %364
      %366 = vrot.lane.b32.xlu0 %v329, 15
      %v367 = vpop.permute.xlu0 %366
      %vm368 = vcmp.lt.s32.totalorder %v353, 15
      %v369 = vsel %vm368, %v365, %v367
      %v370 = vsel %vm368, %v367, %v365
      %371 = vrot.lane.b32.xlu0 %v328, 1
      %v372 = vpop.permute.xlu0 %371
      %373 = vrot.lane.b32.xlu0 %v329, 1
      %v374 = vpop.permute.xlu0 %373
      %vm375 = vcmp.lt.s32.totalorder %v353, 1
      %v376 = vsel %vm375, %v372, %v374
      %v377 = vsel %vm375, %v374, %v372
      %378 = vrot.lane.b32.xlu0 %v328, 127
      %v379 = vpop.permute.xlu0 %378
      %380 = vrot.lane.b32.xlu0 %v329, 127
      %v381 = vpop.permute.xlu0 %380
      %vm382 = vcmp.lt.s32.totalorder %v353, 127
      %v383 = vsel %vm382, %v379, %v381
      %v384 = vsel %vm382, %v381, %v379
      %385 = vrot.lane.b32.xlu0 %v328, 113
      %v386 = vpop.permute.xlu0 %385
      %387 = vrot.lane.b32.xlu0 %v329, 113
      %v388 = vpop.permute.xlu0 %387
      %vm389 = vcmp.lt.s32.totalorder %v353, 113
      %v390 = vsel %vm389, %v386, %v388
      %v391 = vsel %vm389, %v388, %v386
      %392 = vrot.lane.b32.xlu0 %v328, 112
      %v393 = vpop.permute.xlu0 %392
      %394 = vrot.lane.b32.xlu0 %v329, 112
      %v395 = vpop.permute.xlu0 %394
      %vm396 = vcmp.lt.s32.totalorder %v353, 112
      %v397 = vsel %vm396, %v393, %v395
      %v398 = vsel %vm396, %v395, %v393
      %399 = vrot.lane.b32.xlu0 %v328, 111
      %v400 = vpop.permute.xlu0 %399
      %401 = vrot.lane.b32.xlu0 %v329, 111
      %v402 = vpop.permute.xlu0 %401
      %vm403 = vcmp.lt.s32.totalorder %v353, 111
      %v404 = vsel %vm403, %v400, %v402
      %v405 = vsel %vm403, %v402, %v400
      %v406 = vmul.f32 %v356, %v330
      %v407 = vmul.f32 %v355, %v331
      %v408 = vmul.f32 %v363, %v332
      %v409 = vmul.f32 %v362, %v333
      %v410 = vmul.f32 %v370, %v334
      %v411 = vmul.f32 %v369, %v335
      %v412 = vmul.f32 %v377, %v336
      %v413 = vmul.f32 %v376, %v337
      %v414 = vmul.f32 %v328, %v338
      %v415 = vmul.f32 %v329, %v339
      %v416 = vmul.f32 %v383, %v340
      %v417 = vmul.f32 %v384, %v341
      %v418 = vmul.f32 %v390, %v342
      %v419 = vmul.f32 %v391, %v343
      %v420 = vmul.f32 %v397, %v344
      %v421 = vmul.f32 %v398, %v345
      %v422 = vmul.f32 %v404, %v346
      %v423 = vmul.f32 %v405, %v347
      %v424 = vld [vmem:[%s2] sm:$0xff]
      %v425 = vld [vmem:[%s3] sm:$0xff]
      %427 = vset.pattern.permute.xlu0 1
      %428 = vperm.xlu0 %427, %v425
      %v429 = vpop.permute.xlu0 %428
      %vm431 = vcmask 588800
      %v433 = vsel %vm431, %v424, 0
      %435 = vmatprep.subr.mxu0 %v407
      %436 = vmatpush1.msra.mxu0 %v406
      %437 = vmatprep.subr.mxu0 %v409
      %438 = vmatpush1.msra.mxu0 %v408
      %439 = vmatprep.subr.mxu0 %v411
      %440 = vmatpush1.msra.mxu0 %v410
      %441 = vmatprep.subr.mxu0 %v413
      %442 = vmatpush1.msra.mxu0 %v412
      %443 = vmatprep.subr.mxu0 %v415
      %444 = vmatpush1.msra.mxu0 %v414
      %445 = vmatprep.subr.mxu0 %v417
      %446 = vmatpush1.msra.mxu0 %v416
      %447 = vmatprep.subr.mxu0 %v419
      %448 = vmatpush1.msra.mxu0 %v418
      %449 = vmatprep.subr.mxu0 %v421
      %450 = vmatpush1.msra.mxu0 %v420
      %451 = vmatprep.subr.mxu0 %v423
      %452 = vmatpush1.msra.mxu0 %v422
      %453 = vmatprep.subr.mxu0 0.0
      %454 = vmatpush1.msra.mxu0 0.0
      %455 = vmatprep.subr.mxu0 0.0
      %456 = vmatpush1.msra.mxu0 0.0
      %457 = vmatprep.subr.mxu0 0.0
      %458 = vmatpush1.msra.mxu0 0.0
      %459 = vmatprep.subr.mxu0 0.0
      %460 = vmatpush1.msra.mxu0 0.0
      %461 = vmatprep.subr.mxu0 0.0
      %462 = vmatpush1.msra.mxu0 0.0
      %463 = vmatprep.subr.mxu0 0.0
      %464 = vmatpush1.msra.mxu0 0.0
      %465 = vmatprep.subr.mxu0 0.0
      %466 = vmatpush1.msra.mxu0 0.0
      %467 = vmatprep.subr.mxu0 0.0
      %468 = vmatpush1.msra.mxu0 0.0
      %469 = vmatprep.subr.mxu0 0.0
      %470 = vmatpush1.msra.mxu0 0.0
      %471 = vmatprep.subr.mxu0 0.0
      %472 = vmatpush1.msra.mxu0 0.0
      %473 = vmatprep.subr.mxu0 0.0
      %474 = vmatpush1.msra.mxu0 0.0
      %475 = vmatprep.subr.mxu0 0.0
      %476 = vmatpush1.msra.mxu0 0.0
      %477 = vmatprep.subr.mxu0 0.0
      %478 = vmatpush1.msra.mxu0 0.0
      %479 = vmatprep.subr.mxu0 0.0
      %480 = vmatpush1.msra.mxu0 0.0
      %481 = vmatprep.subr.mxu0 0.0
      %482 = vmatpush1.msra.mxu0 0.0
      %483 = vmatprep.subr.mxu0 0.0
      %484 = vmatpush1.msra.mxu0 0.0
      %485 = vmatprep.subr.mxu0 0.0
      %486 = vmatpush1.msra.mxu0 0.0
      %487 = vmatprep.subr.mxu0 0.0
      %488 = vmatpush1.msra.mxu0 0.0
      %489 = vmatprep.subr.mxu0 0.0
      %490 = vmatpush1.msra.mxu0 0.0
      %491 = vmatprep.subr.mxu0 0.0
      %492 = vmatpush1.msra.mxu0 0.0
      %493 = vmatprep.subr.mxu0 0.0
      %494 = vmatpush1.msra.mxu0 0.0
      %495 = vmatprep.subr.mxu0 0.0
      %496 = vmatpush1.msra.mxu0 0.0
      %497 = vmatprep.subr.mxu0 0.0
      %498 = vmatpush1.msra.mxu0 0.0
      %499 = vmatprep.mubr.f32.mxu0 0.0
      %500 = vmatmul.mubr.f32.gmra.mrb[0].mxu0 %v433
      %v501 = vpop.f32.mrb[0].mxu0
      %v502 = vadd.f32 %v429, %v501
      %v503 = vpop.f32.mrb[0].mxu0
      %v504 = vadd.f32 %v429, %v503
      %505 = vdwg.mxu0
      %v506 = vsub.f32 0.0, %v502
      %v507 = vsub.f32 0.0, %v504
      %v508 = vmul.f32 %v506, 1.442695
      %v509 = vpow.pop %v508
      %v510 = vmul.f32 %v507, 1.442695
      %v511 = vpow.pop %v510
      %v512 = vadd.f32 %v509, 1.0
      %v513 = vadd.f32 %v511, 1.0
      %v514 = vrcp.pop %v512
      %v515 = vrcp.pop %v513
      %v516 = vmul.f32 %v502, %v514
      %v517 = vmul.f32 %v504, %v515
      %518 = vrot.lane.b32.xlu0 %v516, 17
      %v519 = vpop.permute.xlu0 %518
      %520 = vrot.lane.b32.xlu0 %v517, 17
      %v521 = vpop.permute.xlu0 %520
      %v522 = vsel %vm354, %v519, %v521
      %v523 = vsel %vm354, %v521, %v519
      %524 = vrot.lane.b32.xlu0 %v516, 16
      %v525 = vpop.permute.xlu0 %524
      %526 = vrot.lane.b32.xlu0 %v517, 16
      %v527 = vpop.permute.xlu0 %526
      %v528 = vsel %vm361, %v525, %v527
      %v529 = vsel %vm361, %v527, %v525
      %530 = vrot.lane.b32.xlu0 %v516, 15
      %v531 = vpop.permute.xlu0 %530
      %532 = vrot.lane.b32.xlu0 %v517, 15
      %v533 = vpop.permute.xlu0 %532
      %v534 = vsel %vm368, %v531, %v533
      %v535 = vsel %vm368, %v533, %v531
      %536 = vrot.lane.b32.xlu0 %v516, 1
      %v537 = vpop.permute.xlu0 %536
      %538 = vrot.lane.b32.xlu0 %v517, 1
      %v539 = vpop.permute.xlu0 %538
      %v540 = vsel %vm375, %v537, %v539
      %v541 = vsel %vm375, %v539, %v537
      %542 = vrot.lane.b32.xlu0 %v516, 127
      %v543 = vpop.permute.xlu0 %542
      %544 = vrot.lane.b32.xlu0 %v517, 127
      %v545 = vpop.permute.xlu0 %544
      %v546 = vsel %vm382, %v543, %v545
      %v547 = vsel %vm382, %v545, %v543
      %548 = vrot.lane.b32.xlu0 %v516, 113
      %v549 = vpop.permute.xlu0 %548
      %550 = vrot.lane.b32.xlu0 %v517, 113
      %v551 = vpop.permute.xlu0 %550
      %v552 = vsel %vm389, %v549, %v551
      %v553 = vsel %vm389, %v551, %v549
      %554 = vrot.lane.b32.xlu0 %v516, 112
      %v555 = vpop.permute.xlu0 %554
      %556 = vrot.lane.b32.xlu0 %v517, 112
      %v557 = vpop.permute.xlu0 %556
      %v558 = vsel %vm396, %v555, %v557
      %v559 = vsel %vm396, %v557, %v555
      %560 = vrot.lane.b32.xlu0 %v516, 111
      %v561 = vpop.permute.xlu0 %560
      %562 = vrot.lane.b32.xlu0 %v517, 111
      %v563 = vpop.permute.xlu0 %562
      %v564 = vsel %vm403, %v561, %v563
      %v565 = vsel %vm403, %v563, %v561
      %v566 = vmul.f32 %v523, %v330
      %v567 = vmul.f32 %v522, %v331
      %v568 = vmul.f32 %v529, %v332
      %v569 = vmul.f32 %v528, %v333
      %v570 = vmul.f32 %v535, %v334
      %v571 = vmul.f32 %v534, %v335
      %v572 = vmul.f32 %v541, %v336
      %v573 = vmul.f32 %v540, %v337
      %v574 = vmul.f32 %v516, %v338
      %v575 = vmul.f32 %v517, %v339
      %v576 = vmul.f32 %v546, %v340
      %v577 = vmul.f32 %v547, %v341
      %v578 = vmul.f32 %v552, %v342
      %v579 = vmul.f32 %v553, %v343
      %v580 = vmul.f32 %v558, %v344
      %v581 = vmul.f32 %v559, %v345
      %v582 = vmul.f32 %v564, %v346
      %v583 = vmul.f32 %v565, %v347
      %s584 = scalar_lea.vmem %s2, 8
      %v585 = vld [vmem:[%s584] sm:$0xff]
      %586 = vset.pattern.permute.xlu0 2
      %587 = vperm.xlu0 %586, %v425
      %v588 = vpop.permute.xlu0 %587
      %v591 = vsel %vm431, %v585, 0
      %593 = vmatprep.subr.mxu0 %v567
      %594 = vmatpush1.msra.mxu0 %v566
      %595 = vmatprep.subr.mxu0 %v569
      %596 = vmatpush1.msra.mxu0 %v568
      %597 = vmatprep.subr.mxu0 %v571
      %598 = vmatpush1.msra.mxu0 %v570
      %599 = vmatprep.subr.mxu0 %v573
      %600 = vmatpush1.msra.mxu0 %v572
      %601 = vmatprep.subr.mxu0 %v575
      %602 = vmatpush1.msra.mxu0 %v574
      %603 = vmatprep.subr.mxu0 %v577
      %604 = vmatpush1.msra.mxu0 %v576
      %605 = vmatprep.subr.mxu0 %v579
      %606 = vmatpush1.msra.mxu0 %v578
      %607 = vmatprep.subr.mxu0 %v581
      %608 = vmatpush1.msra.mxu0 %v580
      %609 = vmatprep.subr.mxu0 %v583
      %610 = vmatpush1.msra.mxu0 %v582
      %611 = vmatprep.subr.mxu0 0.0
      %612 = vmatpush1.msra.mxu0 0.0
      %613 = vmatprep.subr.mxu0 0.0
      %614 = vmatpush1.msra.mxu0 0.0
      %615 = vmatprep.subr.mxu0 0.0
      %616 = vmatpush1.msra.mxu0 0.0
      %617 = vmatprep.subr.mxu0 0.0
      %618 = vmatpush1.msra.mxu0 0.0
      %619 = vmatprep.subr.mxu0 0.0
      %620 = vmatpush1.msra.mxu0 0.0
      %621 = vmatprep.subr.mxu0 0.0
      %622 = vmatpush1.msra.mxu0 0.0
      %623 = vmatprep.subr.mxu0 0.0
      %624 = vmatpush1.msra.mxu0 0.0
      %625 = vmatprep.subr.mxu0 0.0
      %626 = vmatpush1.msra.mxu0 0.0
      %627 = vmatprep.subr.mxu0 0.0
      %628 = vmatpush1.msra.mxu0 0.0
      %629 = vmatprep.subr.mxu0 0.0
      %630 = vmatpush1.msra.mxu0 0.0
      %631 = vmatprep.subr.mxu0 0.0
      %632 = vmatpush1.msra.mxu0 0.0
      %633 = vmatprep.subr.mxu0 0.0
      %634 = vmatpush1.msra.mxu0 0.0
      %635 = vmatprep.subr.mxu0 0.0
      %636 = vmatpush1.msra.mxu0 0.0
      %637 = vmatprep.subr.mxu0 0.0
      %638 = vmatpush1.msra.mxu0 0.0
      %639 = vmatprep.subr.mxu0 0.0
      %640 = vmatpush1.msra.mxu0 0.0
      %641 = vmatprep.subr.mxu0 0.0
      %642 = vmatpush1.msra.mxu0 0.0
      %643 = vmatprep.subr.mxu0 0.0
      %644 = vmatpush1.msra.mxu0 0.0
      %645 = vmatprep.subr.mxu0 0.0
      %646 = vmatpush1.msra.mxu0 0.0
      %647 = vmatprep.subr.mxu0 0.0
      %648 = vmatpush1.msra.mxu0 0.0
      %649 = vmatprep.subr.mxu0 0.0
      %650 = vmatpush1.msra.mxu0 0.0
      %651 = vmatprep.subr.mxu0 0.0
      %652 = vmatpush1.msra.mxu0 0.0
      %653 = vmatprep.subr.mxu0 0.0
      %654 = vmatpush1.msra.mxu0 0.0
      %655 = vmatprep.subr.mxu0 0.0
      %656 = vmatpush1.msra.mxu0 0.0
      %657 = vmatprep.mubr.f32.mxu0 0.0
      %658 = vmatmul.mubr.f32.gmra.mrb[0].mxu0 %v591
      %v659 = vpop.f32.mrb[0].mxu0
      %v660 = vadd.f32 %v588, %v659
      %v661 = vpop.f32.mrb[0].mxu0
      %v662 = vadd.f32 %v588, %v661
      %663 = vdwg.mxu0
      %v664 = vsub.f32 0.0, %v660
      %v665 = vsub.f32 0.0, %v662
      %v666 = vmul.f32 %v664, 1.442695
      %v667 = vpow.pop %v666
      %v668 = vmul.f32 %v665, 1.442695
      %v669 = vpow.pop %v668
      %v670 = vadd.f32 %v667, 1.0
      %v671 = vadd.f32 %v669, 1.0
      %v672 = vrcp.pop %v670
      %v673 = vrcp.pop %v671
      %v674 = vmul.f32 %v660, %v672
      %v675 = vmul.f32 %v662, %v673
      %676 = vrot.lane.b32.xlu0 %v674, 17
      %v677 = vpop.permute.xlu0 %676
      %678 = vrot.lane.b32.xlu0 %v675, 17
      %v679 = vpop.permute.xlu0 %678
      %v680 = vsel %vm354, %v677, %v679
      %v681 = vsel %vm354, %v679, %v677
      %682 = vrot.lane.b32.xlu0 %v674, 16
      %v683 = vpop.permute.xlu0 %682
      %684 = vrot.lane.b32.xlu0 %v675, 16
      %v685 = vpop.permute.xlu0 %684
      %v686 = vsel %vm361, %v683, %v685
      %v687 = vsel %vm361, %v685, %v683
      %688 = vrot.lane.b32.xlu0 %v674, 15
      %v689 = vpop.permute.xlu0 %688
      %690 = vrot.lane.b32.xlu0 %v675, 15
      %v691 = vpop.permute.xlu0 %690
      %v692 = vsel %vm368, %v689, %v691
      %v693 = vsel %vm368, %v691, %v689
      %694 = vrot.lane.b32.xlu0 %v674, 1
      %v695 = vpop.permute.xlu0 %694
      %696 = vrot.lane.b32.xlu0 %v675, 1
      %v697 = vpop.permute.xlu0 %696
      %v698 = vsel %vm375, %v695, %v697
      %v699 = vsel %vm375, %v697, %v695
      %700 = vrot.lane.b32.xlu0 %v674, 127
      %v701 = vpop.permute.xlu0 %700
      %702 = vrot.lane.b32.xlu0 %v675, 127
      %v703 = vpop.permute.xlu0 %702
      %v704 = vsel %vm382, %v701, %v703
      %v705 = vsel %vm382, %v703, %v701
      %706 = vrot.lane.b32.xlu0 %v674, 113
      %v707 = vpop.permute.xlu0 %706
      %708 = vrot.lane.b32.xlu0 %v675, 113
      %v709 = vpop.permute.xlu0 %708
      %v710 = vsel %vm389, %v707, %v709
      %v711 = vsel %vm389, %v709, %v707
      %712 = vrot.lane.b32.xlu0 %v674, 112
      %v713 = vpop.permute.xlu0 %712
      %714 = vrot.lane.b32.xlu0 %v675, 112
      %v715 = vpop.permute.xlu0 %714
      %v716 = vsel %vm396, %v713, %v715
      %v717 = vsel %vm396, %v715, %v713
      %718 = vrot.lane.b32.xlu0 %v674, 111
      %v719 = vpop.permute.xlu0 %718
      %720 = vrot.lane.b32.xlu0 %v675, 111
      %v721 = vpop.permute.xlu0 %720
      %v722 = vsel %vm403, %v719, %v721
      %v723 = vsel %vm403, %v721, %v719
      %v724 = vmul.f32 %v681, %v330
      %v725 = vmul.f32 %v680, %v331
      %v726 = vmul.f32 %v687, %v332
      %v727 = vmul.f32 %v686, %v333
      %v728 = vmul.f32 %v693, %v334
      %v729 = vmul.f32 %v692, %v335
      %v730 = vmul.f32 %v699, %v336
      %v731 = vmul.f32 %v698, %v337
      %v732 = vmul.f32 %v674, %v338
      %v733 = vmul.f32 %v675, %v339
      %v734 = vmul.f32 %v704, %v340
      %v735 = vmul.f32 %v705, %v341
      %v736 = vmul.f32 %v710, %v342
      %v737 = vmul.f32 %v711, %v343
      %v738 = vmul.f32 %v716, %v344
      %v739 = vmul.f32 %v717, %v345
      %v740 = vmul.f32 %v722, %v346
      %v741 = vmul.f32 %v723, %v347
      %s742 = scalar_lea.vmem %s2, 16
      %v743 = vld [vmem:[%s742] sm:$0xff]
      %744 = vset.pattern.permute.xlu0 3
      %745 = vperm.xlu0 %744, %v425
      %v746 = vpop.permute.xlu0 %745
      %v749 = vsel %vm431, %v743, 0
      %751 = vmatprep.subr.mxu0 %v725
      %752 = vmatpush1.msra.mxu0 %v724
      %753 = vmatprep.subr.mxu0 %v727
      %754 = vmatpush1.msra.mxu0 %v726
      %755 = vmatprep.subr.mxu0 %v729
      %756 = vmatpush1.msra.mxu0 %v728
      %757 = vmatprep.subr.mxu0 %v731
      %758 = vmatpush1.msra.mxu0 %v730
      %759 = vmatprep.subr.mxu0 %v733
      %760 = vmatpush1.msra.mxu0 %v732
      %761 = vmatprep.subr.mxu0 %v735
      %762 = vmatpush1.msra.mxu0 %v734
      %763 = vmatprep.subr.mxu0 %v737
      %764 = vmatpush1.msra.mxu0 %v736
      %765 = vmatprep.subr.mxu0 %v739
      %766 = vmatpush1.msra.mxu0 %v738
      %767 = vmatprep.subr.mxu0 %v741
      %768 = vmatpush1.msra.mxu0 %v740
      %769 = vmatprep.subr.mxu0 0.0
      %770 = vmatpush1.msra.mxu0 0.0
      %771 = vmatprep.subr.mxu0 0.0
      %772 = vmatpush1.msra.mxu0 0.0
      %773 = vmatprep.subr.mxu0 0.0
      %774 = vmatpush1.msra.mxu0 0.0
      %775 = vmatprep.subr.mxu0 0.0
      %776 = vmatpush1.msra.mxu0 0.0
      %777 = vmatprep.subr.mxu0 0.0
      %778 = vmatpush1.msra.mxu0 0.0
      %779 = vmatprep.subr.mxu0 0.0
      %780 = vmatpush1.msra.mxu0 0.0
      %781 = vmatprep.subr.mxu0 0.0
      %782 = vmatpush1.msra.mxu0 0.0
      %783 = vmatprep.subr.mxu0 0.0
      %784 = vmatpush1.msra.mxu0 0.0
      %785 = vmatprep.subr.mxu0 0.0
      %786 = vmatpush1.msra.mxu0 0.0
      %787 = vmatprep.subr.mxu0 0.0
      %788 = vmatpush1.msra.mxu0 0.0
      %789 = vmatprep.subr.mxu0 0.0
      %790 = vmatpush1.msra.mxu0 0.0
      %791 = vmatprep.subr.mxu0 0.0
      %792 = vmatpush1.msra.mxu0 0.0
      %793 = vmatprep.subr.mxu0 0.0
      %794 = vmatpush1.msra.mxu0 0.0
      %795 = vmatprep.subr.mxu0 0.0
      %796 = vmatpush1.msra.mxu0 0.0
      %797 = vmatprep.subr.mxu0 0.0
      %798 = vmatpush1.msra.mxu0 0.0
      %799 = vmatprep.subr.mxu0 0.0
      %800 = vmatpush1.msra.mxu0 0.0
      %801 = vmatprep.subr.mxu0 0.0
      %802 = vmatpush1.msra.mxu0 0.0
      %803 = vmatprep.subr.mxu0 0.0
      %804 = vmatpush1.msra.mxu0 0.0
      %805 = vmatprep.subr.mxu0 0.0
      %806 = vmatpush1.msra.mxu0 0.0
      %807 = vmatprep.subr.mxu0 0.0
      %808 = vmatpush1.msra.mxu0 0.0
      %809 = vmatprep.subr.mxu0 0.0
      %810 = vmatpush1.msra.mxu0 0.0
      %811 = vmatprep.subr.mxu0 0.0
      %812 = vmatpush1.msra.mxu0 0.0
      %813 = vmatprep.subr.mxu0 0.0
      %814 = vmatpush1.msra.mxu0 0.0
      %815 = vmatprep.mubr.f32.mxu0 0.0
      %816 = vmatmul.mubr.f32.gmra.mrb[0].mxu0 %v749
      %v817 = vpop.f32.mrb[0].mxu0
      %v818 = vadd.f32 %v746, %v817
      %v819 = vpop.f32.mrb[0].mxu0
      %v820 = vadd.f32 %v746, %v819
      %821 = vdwg.mxu0
      %v822 = vsub.f32 0.0, %v818
      %v823 = vsub.f32 0.0, %v820
      %v824 = vmul.f32 %v822, 1.442695
      %v825 = vpow.pop %v824
      %v826 = vmul.f32 %v823, 1.442695
      %v827 = vpow.pop %v826
      %v828 = vadd.f32 %v825, 1.0
      %v829 = vadd.f32 %v827, 1.0
      %v830 = vrcp.pop %v828
      %v831 = vrcp.pop %v829
      %v832 = vmul.f32 %v818, %v830
      %v833 = vmul.f32 %v820, %v831
      %v836 = vrot.slane %v328, 4
      %v837 = vrot.slane %v329, 4
      %v840 = vadd.f32 %v832, %v836
      %v841 = vadd.f32 %v833, %v837
      %v844 = vcombine.low %v840, %v841
      %846 = vst [vmem:[%s226] sm:$0xff] %v844
      %s847 = smul.u32 2, %s16
      %p848 = scmp.lt.s32.totalorder %s847, 3
      %s849 = scalar_select %p848, %s847, 3
      %s850 = smul.addr %s849, 4
      %s851 = scalar_lea.vmem %s5, %s850
      // Predicated region
      $region41: #{repc3_forward.1} parent=39 // pred_check
        %p852 = pneg %p144
      $region42: #{repc3_forward.1} parent=39 // pred_check_branch
        %854 = sbr.rel (%p852) target = $region44
      $region43: #{repc3_forward.1} parent=39 // pred_region
        %s855 = smul.u32 2, %s16
      $region44: #{repc3_forward.1} parent=39 // pred_fallthru
        _
    $region40: #{repc3_forward.1} parent=5 // pred_fallthru
      _
    %p856 = scmp.le.s32.totalorder 2, %s11
    // Predicated region
    $region45: #{repc3_forward.1} parent=5 // pred_check
      %p857 = pneg %p856
    $region46: #{repc3_forward.1} parent=5 // pred_check_branch
      %859 = sbr.rel (%p857) target = $region48
    $region47: #{repc3_forward.1} parent=5 // pred_region
      %s860 = ssub.s32 %s11, 2
      // Predicated region
      $region49: #{repc3_forward.1} parent=47 // pred_check
        %p861 = pneg %p150
      $region50: #{repc3_forward.1} parent=47 // pred_check_branch
        %863 = sbr.rel (%p861) target = $region52
      $region51: #{repc3_forward.1} parent=47 // pred_region
        %s864 = smul.u32 2, %s17
        %p865 = scmp.lt.s32.totalorder %s864, 3
        %s866 = scalar_select %p865, %s864, 3
        %s867 = smul.addr %s866, 4
        %s868 = scalar_lea.vmem %s5, %s867
      $region52: #{repc3_forward.1} parent=47 // pred_fallthru
        _
    $region48: #{repc3_forward.1} parent=5 // pred_fallthru
      _
  $region6: #{repc3_forward.1} parent=0 // loop_footer
    %s15 = sadd.s32 1, %s11
  $region7: #{repc3_forward.1} parent=0 // loop_footer_branch
    %10 = sbr.rel target = $region3
  $region8: #{repc3_forward.1} parent=0 // loop_exit
    _

</llo_original>
